<compile_context>
chip_gen: v5e
topology: v5e:2x2
jax: 0.10.0
libtpu: 0.0.40
codegen_flags: <defaults>
</compile_context>

<pallas_src>
import jax
import jax.numpy as jnp
from jax.experimental import pallas as pl
from jax.experimental.pallas import tpu as pltpu


# ----------------------------------------------------------------------------
# Fused kernel: 3 x GraphConv(+ReLU) -> mean_nodes -> Linear -> sigmoid
# ----------------------------------------------------------------------------
def gcn3_names_kernel(nfeats_ref, names_ref, adj_ref,
                      w1a_ref, w1b_ref, b1_ref,
                      w2_ref, b2_ref, w3_ref, b3_ref,
                      wcls_ref, bcls_ref, out_ref):
    adj = adj_ref[...]                                       # [N, N], A[dst, src]

    # --- GCN symmetric normalization, computed once and reused by all layers.
    in_deg = jnp.sum(adj, axis=1, keepdims=True)             # [N, 1]  in-degree(dst)
    out_deg = jnp.sum(adj, axis=0, keepdims=True)            # [1, N]  out-degree(src)
    in_norm = jax.lax.rsqrt(jnp.maximum(in_deg, 1.0))        # clamp(min=1), ^-0.5
    out_norm = jax.lax.rsqrt(jnp.maximum(out_deg, 1.0))
    adj_n = adj * in_norm * out_norm                         # D_in^-1/2 A D_out^-1/2

    # --- Layer 1: cat(nfeats, names) @ W1 as a split matmul (no lane concat).
    z = (jnp.dot(nfeats_ref[...], w1a_ref[...], preferred_element_type=jnp.float32)
         + jnp.dot(names_ref[...], w1b_ref[...], preferred_element_type=jnp.float32))
    h = jnp.dot(adj_n, z, preferred_element_type=jnp.float32) + b1_ref[...]
    h = jnp.maximum(h, 0.0)                                  # F.relu

    # --- Layer 2
    z = jnp.dot(h, w2_ref[...], preferred_element_type=jnp.float32)
    h = jnp.dot(adj_n, z, preferred_element_type=jnp.float32) + b2_ref[...]
    h = jnp.maximum(h, 0.0)

    # --- Layer 3
    z = jnp.dot(h, w3_ref[...], preferred_element_type=jnp.float32)
    h = jnp.dot(adj_n, z, preferred_element_type=jnp.float32) + b3_ref[...]
    h = jnp.maximum(h, 0.0)

    # --- dgl.mean_nodes (single graph) -> [1, hidden]
    hg = jnp.mean(h, axis=0, keepdims=True)
    # F.dropout is identity in eval mode (training=False).

    # --- classifier Linear(hidden, 1) + sigmoid
    logit = jnp.dot(hg, wcls_ref[...], preferred_element_type=jnp.float32) + bcls_ref[...]
    out_ref[...] = jax.nn.sigmoid(logit)                     # [1, 1]


# ----------------------------------------------------------------------------
# Wrapper: single fused pallas_call (no grid; everything fits in VMEM)
# ----------------------------------------------------------------------------
def _vmem_spec():
    return pl.BlockSpec(memory_space=pltpu.MemorySpace.VMEM)


def gcn3_names_forward(params, nfeats, names, adj):
    N, F1 = nfeats.shape
    F2 = names.shape[1]
    H = params["w2"].shape[0]

    # Split W1 so the concat(nfeats, names) @ W1 becomes two aligned matmuls.
    w1a = params["w1"][:F1]                                  # [F1, H]
    w1b = params["w1"][F1:]                                  # [F2, H]

    flops = (2 * N * (F1 + F2) * H        # layer-1 feature transform
             + 2 * 2 * N * H * H          # layer-2/3 feature transforms
             + 3 * 2 * N * N * H          # 3x normalized-adjacency aggregations
             + 2 * N * H + 2 * H)         # mean-pool + classifier
    bytes_accessed = 4 * (nfeats.size + names.size + adj.size
                          + sum(int(p.size) for p in params.values()) + 1)
    cost = pl.CostEstimate(flops=flops,
                           transcendentals=2 * N + 1,        # rsqrt x 2N + sigmoid
                           bytes_accessed=bytes_accessed)

    return pl.pallas_call(
        gcn3_names_kernel,
        out_shape=jax.ShapeDtypeStruct((1, 1), jnp.float32),
        in_specs=[_vmem_spec() for _ in range(12)],
        out_specs=_vmem_spec(),
        cost_estimate=cost,
    )(nfeats, names, adj,
      w1a, w1b, params["b1"],
      params["w2"], params["b2"],
      params["w3"], params["b3"],
      params["cls_w"], params["cls_b"])


# ----------------------------------------------------------------------------
# Deterministic parameter construction
# ----------------------------------------------------------------------------
def make_params(key, num_features, hidden_dim):
    ks = iter(jax.random.split(key, 16))

    def u(k, shape, scale=0.2):
        return jax.random.uniform(k, shape, jnp.float32, -scale, scale)

    return {
        "w1": u(next(ks), (num_features, hidden_dim)),       # conv1 weight
        "b1": u(next(ks), (1, hidden_dim)),                  # conv1 bias
        "w2": u(next(ks), (hidden_dim, hidden_dim)),         # conv2 weight
        "b2": u(next(ks), (1, hidden_dim)),                  # conv2 bias
        "w3": u(next(ks), (hidden_dim, hidden_dim)),         # conv3 weight
        "b3": u(next(ks), (1, hidden_dim)),                  # conv3 bias
        "cls_w": u(next(ks), (hidden_dim, 1)),               # classifier weight^T
        "cls_b": u(next(ks), (1, 1)),                        # classifier bias
    }


if __name__ == "__main__":
    N = 16                # nodes in the (single) graph
    NFEAT_DIM = 24        # nfeats dim (sublane-aligned)
    NAMES_DIM = 8         # g.ndata['names'] dim (sublane-aligned)
    HIDDEN = 32           # hidden_dim
    NUM_FEATURES = NFEAT_DIM + NAMES_DIM

    key = jax.random.PRNGKey(0)
    k_nf, k_nm, k_adj, k_par = jax.random.split(key, 4)

    nfeats = jax.random.normal(k_nf, (N, NFEAT_DIM), jnp.float32)
    names = jax.random.normal(k_nm, (N, NAMES_DIM), jnp.float32)

    # Undirected random graph with self-loops (no zero-degree nodes, as DGL
    # GraphConv requires).  adj[dst, src] = 1 for each edge src -> dst.
    rand = (jax.random.uniform(k_adj, (N, N)) < 0.3).astype(jnp.float32)
    adj = jnp.maximum(jnp.maximum(rand, rand.T), jnp.eye(N, dtype=jnp.float32))

    params = make_params(k_par, NUM_FEATURES, HIDDEN)

    fwd = jax.jit(gcn3_names_forward)
    out = jax.block_until_ready(fwd(params, nfeats, names, adj))

    assert out.shape == (1, 1), out.shape
    assert bool(jnp.all(jnp.isfinite(out)))
    assert bool(jnp.all((out >= 0.0) & (out <= 1.0)))
    print("KERNEL_OK")
</pallas_src>

<mosaic_0001>
module attributes {stable_mosaic.version = 11 : i64} {
  func.func @gcn3_names_kernel(%arg0: memref<16x24xf32, #tpu.memory_space<vmem>>, %arg1: memref<16x8xf32, #tpu.memory_space<vmem>>, %arg2: memref<16x16xf32, #tpu.memory_space<vmem>>, %arg3: memref<24x32xf32, #tpu.memory_space<vmem>>, %arg4: memref<8x32xf32, #tpu.memory_space<vmem>>, %arg5: memref<1x32xf32, #tpu.memory_space<vmem>>, %arg6: memref<32x32xf32, #tpu.memory_space<vmem>>, %arg7: memref<1x32xf32, #tpu.memory_space<vmem>>, %arg8: memref<32x32xf32, #tpu.memory_space<vmem>>, %arg9: memref<1x32xf32, #tpu.memory_space<vmem>>, %arg10: memref<32x1xf32, #tpu.memory_space<vmem>>, %arg11: memref<1x1xf32, #tpu.memory_space<vmem>>, %arg12: memref<1x1xf32, #tpu.memory_space<vmem>>) attributes {dimension_semantics = [], scalar_prefetch = 0 : i64, scratch_operands = 0 : i64, tpu.core_type = #tpu.core_type<tc>} {
    %c0 = arith.constant 0 : index
    %c0_0 = arith.constant 0 : index
    %0 = vector.load %arg2[%c0, %c0_0] : memref<16x16xf32, #tpu.memory_space<vmem>>, vector<16x16xf32>
    %cst = arith.constant dense<0.000000e+00> : vector<16xf32>
    %1 = vector.multi_reduction <add>, %0, %cst [1] : vector<16x16xf32> to vector<16xf32>
    %2 = vector.shape_cast %1 : vector<16xf32> to vector<16x1xf32>
    %cst_1 = arith.constant dense<0.000000e+00> : vector<16xf32>
    %3 = vector.multi_reduction <add>, %0, %cst_1 [0] : vector<16x16xf32> to vector<16xf32>
    %4 = vector.shape_cast %3 : vector<16xf32> to vector<1x16xf32>
    %cst_2 = arith.constant 1.000000e+00 : f32
    %5 = vector.broadcast %cst_2 : f32 to vector<16x1xf32>
    %6 = arith.maximumf %2, %5 : vector<16x1xf32>
    %7 = math.rsqrt %6 : vector<16x1xf32>
    %cst_3 = arith.constant 1.000000e+00 : f32
    %8 = vector.broadcast %cst_3 : f32 to vector<1x16xf32>
    %9 = arith.maximumf %4, %8 : vector<1x16xf32>
    %10 = math.rsqrt %9 : vector<1x16xf32>
    %11 = vector.broadcast %7 : vector<16x1xf32> to vector<16x16xf32>
    %12 = arith.mulf %0, %11 : vector<16x16xf32>
    %13 = vector.broadcast %10 : vector<1x16xf32> to vector<16x16xf32>
    %14 = arith.mulf %12, %13 : vector<16x16xf32>
    %c0_4 = arith.constant 0 : index
    %c0_5 = arith.constant 0 : index
    %15 = vector.load %arg0[%c0_4, %c0_5] : memref<16x24xf32, #tpu.memory_space<vmem>>, vector<16x24xf32>
    %c0_6 = arith.constant 0 : index
    %c0_7 = arith.constant 0 : index
    %16 = vector.load %arg3[%c0_6, %c0_7] : memref<24x32xf32, #tpu.memory_space<vmem>>, vector<24x32xf32>
    %cst_8 = arith.constant dense<0.000000e+00> : vector<16x32xf32>
    %17 = tpu.matmul %15, %16, %cst_8 {dimension_numbers = #tpu.dot_dimension_numbers<[1], [0], [0], [1], [0, 0, 1, 1], [], []>} : vector<16x24xf32>, vector<24x32xf32>, vector<16x32xf32> -> vector<16x32xf32>
    %c0_9 = arith.constant 0 : index
    %c0_10 = arith.constant 0 : index
    %18 = vector.load %arg1[%c0_9, %c0_10] : memref<16x8xf32, #tpu.memory_space<vmem>>, vector<16x8xf32>
    %c0_11 = arith.constant 0 : index
    %c0_12 = arith.constant 0 : index
    %19 = vector.load %arg4[%c0_11, %c0_12] : memref<8x32xf32, #tpu.memory_space<vmem>>, vector<8x32xf32>
    %cst_13 = arith.constant dense<0.000000e+00> : vector<16x32xf32>
    %20 = tpu.matmul %18, %19, %cst_13 {dimension_numbers = #tpu.dot_dimension_numbers<[1], [0], [0], [1], [0, 0, 1, 1], [], []>} : vector<16x8xf32>, vector<8x32xf32>, vector<16x32xf32> -> vector<16x32xf32>
    %21 = arith.addf %17, %20 : vector<16x32xf32>
    %cst_14 = arith.constant dense<0.000000e+00> : vector<16x32xf32>
    %22 = tpu.matmul %14, %21, %cst_14 {dimension_numbers = #tpu.dot_dimension_numbers<[1], [0], [0], [1], [0, 0, 1, 1], [], []>} : vector<16x16xf32>, vector<16x32xf32>, vector<16x32xf32> -> vector<16x32xf32>
    %c0_15 = arith.constant 0 : index
    %c0_16 = arith.constant 0 : index
    %23 = vector.load %arg5[%c0_15, %c0_16] : memref<1x32xf32, #tpu.memory_space<vmem>>, vector<1x32xf32>
    %24 = vector.broadcast %23 : vector<1x32xf32> to vector<16x32xf32>
    %25 = arith.addf %22, %24 : vector<16x32xf32>
    %cst_17 = arith.constant 0.000000e+00 : f32
    %26 = vector.broadcast %cst_17 : f32 to vector<16x32xf32>
    %27 = arith.maximumf %25, %26 : vector<16x32xf32>
    %c0_18 = arith.constant 0 : index
    %c0_19 = arith.constant 0 : index
    %28 = vector.load %arg6[%c0_18, %c0_19] : memref<32x32xf32, #tpu.memory_space<vmem>>, vector<32x32xf32>
    %cst_20 = arith.constant dense<0.000000e+00> : vector<16x32xf32>
    %29 = tpu.matmul %27, %28, %cst_20 {dimension_numbers = #tpu.dot_dimension_numbers<[1], [0], [0], [1], [0, 0, 1, 1], [], []>} : vector<16x32xf32>, vector<32x32xf32>, vector<16x32xf32> -> vector<16x32xf32>
    %cst_21 = arith.constant dense<0.000000e+00> : vector<16x32xf32>
    %30 = tpu.matmul %14, %29, %cst_21 {dimension_numbers = #tpu.dot_dimension_numbers<[1], [0], [0], [1], [0, 0, 1, 1], [], []>} : vector<16x16xf32>, vector<16x32xf32>, vector<16x32xf32> -> vector<16x32xf32>
    %c0_22 = arith.constant 0 : index
    %c0_23 = arith.constant 0 : index
    %31 = vector.load %arg7[%c0_22, %c0_23] : memref<1x32xf32, #tpu.memory_space<vmem>>, vector<1x32xf32>
    %32 = vector.broadcast %31 : vector<1x32xf32> to vector<16x32xf32>
    %33 = arith.addf %30, %32 : vector<16x32xf32>
    %cst_24 = arith.constant 0.000000e+00 : f32
    %34 = vector.broadcast %cst_24 : f32 to vector<16x32xf32>
    %35 = arith.maximumf %33, %34 : vector<16x32xf32>
    %c0_25 = arith.constant 0 : index
    %c0_26 = arith.constant 0 : index
    %36 = vector.load %arg8[%c0_25, %c0_26] : memref<32x32xf32, #tpu.memory_space<vmem>>, vector<32x32xf32>
    %cst_27 = arith.constant dense<0.000000e+00> : vector<16x32xf32>
    %37 = tpu.matmul %35, %36, %cst_27 {dimension_numbers = #tpu.dot_dimension_numbers<[1], [0], [0], [1], [0, 0, 1, 1], [], []>} : vector<16x32xf32>, vector<32x32xf32>, vector<16x32xf32> -> vector<16x32xf32>
    %cst_28 = arith.constant dense<0.000000e+00> : vector<16x32xf32>
    %38 = tpu.matmul %14, %37, %cst_28 {dimension_numbers = #tpu.dot_dimension_numbers<[1], [0], [0], [1], [0, 0, 1, 1], [], []>} : vector<16x16xf32>, vector<16x32xf32>, vector<16x32xf32> -> vector<16x32xf32>
    %c0_29 = arith.constant 0 : index
    %c0_30 = arith.constant 0 : index
    %39 = vector.load %arg9[%c0_29, %c0_30] : memref<1x32xf32, #tpu.memory_space<vmem>>, vector<1x32xf32>
    %40 = vector.broadcast %39 : vector<1x32xf32> to vector<16x32xf32>
    %41 = arith.addf %38, %40 : vector<16x32xf32>
    %cst_31 = arith.constant 0.000000e+00 : f32
    %42 = vector.broadcast %cst_31 : f32 to vector<16x32xf32>
    %43 = arith.maximumf %41, %42 : vector<16x32xf32>
    %cst_32 = arith.constant dense<0.000000e+00> : vector<32xf32>
    %44 = vector.multi_reduction <add>, %43, %cst_32 [0] : vector<16x32xf32> to vector<32xf32>
    %45 = vector.shape_cast %44 : vector<32xf32> to vector<1x32xf32>
    %cst_33 = arith.constant 1.600000e+01 : f32
    %46 = vector.broadcast %cst_33 : f32 to vector<1x32xf32>
    %47 = arith.divf %45, %46 : vector<1x32xf32>
    %c0_34 = arith.constant 0 : index
    %c0_35 = arith.constant 0 : index
    %48 = vector.load %arg10[%c0_34, %c0_35] : memref<32x1xf32, #tpu.memory_space<vmem>>, vector<32x1xf32>
    %cst_36 = arith.constant dense<0.000000e+00> : vector<1x1xf32>
    %49 = tpu.matmul %47, %48, %cst_36 {dimension_numbers = #tpu.dot_dimension_numbers<[1], [0], [0], [1], [0, 0, 1, 1], [], []>} : vector<1x32xf32>, vector<32x1xf32>, vector<1x1xf32> -> vector<1x1xf32>
    %c0_37 = arith.constant 0 : index
    %c0_38 = arith.constant 0 : index
    %50 = vector.load %arg11[%c0_37, %c0_38] : memref<1x1xf32, #tpu.memory_space<vmem>>, vector<1x1xf32>
    %51 = arith.addf %49, %50 : vector<1x1xf32>
    %52 = arith.negf %51 : vector<1x1xf32>
    %53 = math.exp %52 : vector<1x1xf32>
    %cst_39 = arith.constant 1.000000e+00 : f32
    %54 = vector.broadcast %cst_39 : f32 to vector<1x1xf32>
    %55 = arith.addf %54, %53 : vector<1x1xf32>
    %56 = arith.divf %54, %55 : vector<1x1xf32>
    %c0_40 = arith.constant 0 : index
    %c0_41 = arith.constant 0 : index
    %57 = vector.load %arg12[%c0_40, %c0_41] : memref<1x1xf32, #tpu.memory_space<vmem>>, vector<1x1xf32>
    tpu.vector_store %arg12[%c0_40, %c0_41], %56 {strides = array<i32>} : memref<1x1xf32, #tpu.memory_space<vmem>>, vector<1x1xf32>,
    return
  }
}

</mosaic_0001>

<llo_original>
// kernel: gcn3_names_forward.1
$region0: #{gcn3_names_forward.1}
  #allocation0 [shape = 'u32[]', space=smem, size = 0x4, offset = 0x4, fixed_abs, tag = 'smem constant byte address 0x4 - core index']
  #allocation1 [shape = 'u32[72,128]{1,0:T(1,128)}', space=vmem, size = 0x9000, scoped, tag = 'internal scratch']
  #allocation2 [shape = 'f32[1,1]{1,0:T(1,128)S(1)}', space=vmem, size = 0x200, scoped, tag = 'scoped memory for gcn3_names_forward.1']
  %s0 = inlined_call_operand.vmem [shape: f32[16,24], index: 0, kind: input, shape index: {}]
  %s1 = inlined_call_operand.vmem [shape: f32[16,8], index: 1, kind: input, shape index: {}]
  %s2 = inlined_call_operand.vmem [shape: f32[16,16], index: 2, kind: input, shape index: {}]
  %s3 = inlined_call_operand.vmem [shape: f32[24,32], index: 3, kind: input, shape index: {}]
  %s4 = inlined_call_operand.vmem [shape: f32[8,32], index: 4, kind: input, shape index: {}]
  %s5 = inlined_call_operand.hbm [shape: f32[1,32], index: 5, kind: input, shape index: {}]
  %s6 = inlined_call_operand.vmem [shape: f32[32,32], index: 6, kind: input, shape index: {}]
  %s7 = inlined_call_operand.hbm [shape: f32[1,32], index: 7, kind: input, shape index: {}]
  %s8 = inlined_call_operand.vmem [shape: f32[32,32], index: 8, kind: input, shape index: {}]
  %s9 = inlined_call_operand.hbm [shape: f32[1,32], index: 9, kind: input, shape index: {}]
  %s10 = inlined_call_operand.vmem [shape: f32[32,1], index: 10, kind: input, shape index: {}]
  %s11 = inlined_call_operand.<no memory space> [shape: f32[1,1], index: 11, kind: input, shape index: {}]
  %s12 = inlined_call_operand.hbm [shape: f32[1,1], index: 12, kind: output, shape index: {}]
  %s13 = sld [smem:[#allocation0]]
  $region70: #{gcn3_names_forward.1} parent=0
    _
  %s15 = ssub.s32 1, %s13
  %s16 = scalar_select 0, %s15, %s13
  %v17 = vstv %s11
  %18 = vst [vmem:[#allocation2] sm:$0x1] %v17
  $region1: #{gcn3_names_forward.1} parent=0
    #allocation3 [shape = 'u8[512]{0}', space=vmem, size = 0x400, scoped, tag = 'input window, operand 5, single buffered']
    #allocation4 [shape = 's32[1]{0}', space=sflag, size = 0x4, scoped, tag = 'scoped memory for gcn3_names_forward.1']
    #allocation5 [shape = 's32[1]{0}', space=sflag, size = 0x4, scoped, tag = 'scoped memory for gcn3_names_forward.1']
    #allocation6 [shape = 'u8[512]{0}', space=vmem, size = 0x400, scoped, tag = 'input window, operand 7, single buffered']
    #allocation7 [shape = 's32[1]{0}', space=sflag, size = 0x4, scoped, tag = 'scoped memory for gcn3_names_forward.1']
    #allocation8 [shape = 'u8[512]{0}', space=vmem, size = 0x400, scoped, tag = 'input window, operand 9, single buffered']
    #allocation9 [shape = 'u8[512]{0}', space=vmem, size = 0x400, scoped, tag = 'output window, operand 0, single buffered']
    %19 = vsyncpa [#allocation4], 0
    %20 = vsyncpa [#allocation7], 0
    %21 = vsyncpa [#allocation5], 0
    // Predicated region
    $region2: #{gcn3_names_forward.1} parent=1 // pred_check
      _
    $region3: #{gcn3_names_forward.1} parent=1 // pred_check_branch
      %23 = sbr.rel (0) target = $region5
    $region4: #{gcn3_names_forward.1} parent=1 // pred_region
      _
    $region5: #{gcn3_names_forward.1} parent=1 // pred_fallthru
      _
    // Predicated region
    $region6: #{gcn3_names_forward.1} parent=1 // pred_check
      _
    $region7: #{gcn3_names_forward.1} parent=1 // pred_check_branch
      %25 = sbr.rel (0) target = $region9
    $region8: #{gcn3_names_forward.1} parent=1 // pred_region
      _
    $region9: #{gcn3_names_forward.1} parent=1 // pred_fallthru
      _
    // Predicated region
    $region10: #{gcn3_names_forward.1} parent=1 // pred_check
      _
    $region11: #{gcn3_names_forward.1} parent=1 // pred_check_branch
      %27 = sbr.rel (0) target = $region13
    $region12: #{gcn3_names_forward.1} parent=1 // pred_region
      _
    $region13: #{gcn3_names_forward.1} parent=1 // pred_fallthru
      _
    // Predicated region
    $region14: #{gcn3_names_forward.1} parent=1 // pred_check
      _
    $region15: #{gcn3_names_forward.1} parent=1 // pred_check_branch
      %29 = sbr.rel (0) target = $region17
    $region16: #{gcn3_names_forward.1} parent=1 // pred_region
      _
    $region17: #{gcn3_names_forward.1} parent=1 // pred_fallthru
      _
    // Predicated region
    $region18: #{gcn3_names_forward.1} parent=1 // pred_check
      _
    $region19: #{gcn3_names_forward.1} parent=1 // pred_check_branch
      %31 = sbr.rel (0) target = $region21
    $region20: #{gcn3_names_forward.1} parent=1 // pred_region
      _
    $region21: #{gcn3_names_forward.1} parent=1 // pred_fallthru
      _
    // Predicated region
    $region22: #{gcn3_names_forward.1} parent=1 // pred_check
      _
    $region23: #{gcn3_names_forward.1} parent=1 // pred_check_branch
      %33 = sbr.rel (0) target = $region25
    $region24: #{gcn3_names_forward.1} parent=1 // pred_region
      %35 = vsyncadd [#allocation4], 0
      %s37 = sshll.u32 %s5, 4
      %s38 = int_to_ptr.hbm [resolvable:$true] %s37
      %s39 = sshll.u32 [#allocation3], 4
      %s40 = int_to_ptr.vmem [resolvable:$true] %s39
      %42 = dma.hbm_to_vmem [thread:$0]  %s38, 16, %s40, [#allocation4]
    $region25: #{gcn3_names_forward.1} parent=1 // pred_fallthru
      _
    // Predicated region
    $region26: #{gcn3_names_forward.1} parent=1 // pred_check
      _
    $region27: #{gcn3_names_forward.1} parent=1 // pred_check_branch
      %44 = sbr.rel (0) target = $region29
    $region28: #{gcn3_names_forward.1} parent=1 // pred_region
      _
    $region29: #{gcn3_names_forward.1} parent=1 // pred_fallthru
      _
    // Predicated region
    $region30: #{gcn3_names_forward.1} parent=1 // pred_check
      _
    $region31: #{gcn3_names_forward.1} parent=1 // pred_check_branch
      %46 = sbr.rel (0) target = $region33
    $region32: #{gcn3_names_forward.1} parent=1 // pred_region
      %48 = vsyncadd [#allocation7], 0
      %s50 = sshll.u32 %s7, 4
      %s51 = int_to_ptr.hbm [resolvable:$true] %s50
      %s52 = sshll.u32 [#allocation6], 4
      %s53 = int_to_ptr.vmem [resolvable:$true] %s52
      %55 = dma.hbm_to_vmem [thread:$0]  %s51, 16, %s53, [#allocation7]
    $region33: #{gcn3_names_forward.1} parent=1 // pred_fallthru
      _
    // Predicated region
    $region34: #{gcn3_names_forward.1} parent=1 // pred_check
      _
    $region35: #{gcn3_names_forward.1} parent=1 // pred_check_branch
      %57 = sbr.rel (0) target = $region37
    $region36: #{gcn3_names_forward.1} parent=1 // pred_region
      _
    $region37: #{gcn3_names_forward.1} parent=1 // pred_fallthru
      _
    // Predicated region
    $region38: #{gcn3_names_forward.1} parent=1 // pred_check
      _
    $region39: #{gcn3_names_forward.1} parent=1 // pred_check_branch
      %59 = sbr.rel (0) target = $region41
    $region40: #{gcn3_names_forward.1} parent=1 // pred_region
      %61 = vsyncadd [#allocation7], 0
      %s63 = sshll.u32 %s9, 4
      %s64 = int_to_ptr.hbm [resolvable:$true] %s63
      %s65 = sshll.u32 [#allocation8], 4
      %s66 = int_to_ptr.vmem [resolvable:$true] %s65
      %68 = dma.hbm_to_vmem [thread:$0]  %s64, 16, %s66, [#allocation7]
    $region41: #{gcn3_names_forward.1} parent=1 // pred_fallthru
      _
    // Predicated region
    $region42: #{gcn3_names_forward.1} parent=1 // pred_check
      _
    $region43: #{gcn3_names_forward.1} parent=1 // pred_check_branch
      %70 = sbr.rel (0) target = $region45
    $region44: #{gcn3_names_forward.1} parent=1 // pred_region
      _
    $region45: #{gcn3_names_forward.1} parent=1 // pred_fallthru
      _
    // Predicated region
    $region46: #{gcn3_names_forward.1} parent=1 // pred_check
      _
    $region47: #{gcn3_names_forward.1} parent=1 // pred_check_branch
      %72 = sbr.rel (0) target = $region49
    $region48: #{gcn3_names_forward.1} parent=1 // pred_region
      _
    $region49: #{gcn3_names_forward.1} parent=1 // pred_fallthru
      _
    // Predicated region
    $region50: #{gcn3_names_forward.1} parent=1 // pred_check
      _
    $region51: #{gcn3_names_forward.1} parent=1 // pred_check_branch
      %74 = sbr.rel (0) target = $region53
    $region52: #{gcn3_names_forward.1} parent=1 // pred_region
      %76 = dma.done [#allocation4], 16
    $region53: #{gcn3_names_forward.1} parent=1 // pred_fallthru
      _
    // Predicated region
    $region54: #{gcn3_names_forward.1} parent=1 // pred_check
      _
    $region55: #{gcn3_names_forward.1} parent=1 // pred_check_branch
      %78 = sbr.rel (0) target = $region57
    $region56: #{gcn3_names_forward.1} parent=1 // pred_region
      %80 = dma.done [#allocation7], 16
    $region57: #{gcn3_names_forward.1} parent=1 // pred_fallthru
      _
    // Predicated region
    $region58: #{gcn3_names_forward.1} parent=1 // pred_check
      _
    $region59: #{gcn3_names_forward.1} parent=1 // pred_check_branch
      %82 = sbr.rel (0) target = $region61
    $region60: #{gcn3_names_forward.1} parent=1 // pred_region
      %84 = dma.done [#allocation7], 16
    $region61: #{gcn3_names_forward.1} parent=1 // pred_fallthru
      _
    %v85 = vld [vmem:[%s2] sm:$0xff]
    %v86 = vld [vmem:[%s2 + $0x8] sm:$0xff]
    %vm87 = vcmask 130048
    %v88 = vsel %vm87, %v85, 0.0
    %89 = vadd.xlane.f32.xlu0 %v88
    %v90 = vpop.xlane.xlu0 %89
    %v91 = vsel %vm87, %v86, 0.0
    %92 = vadd.xlane.f32.xlu0 %v91
    %v93 = vpop.xlane.xlu0 %92
    %v94 = vadd.f32 %v88, %v91
    %v95 = vrot.slane %v94, 4
    %v96 = vadd.f32 %v94, %v95
    %v97 = vrot.slane %v96, 2
    %v98 = vadd.f32 %v96, %v97
    %v99 = vrot.slane %v98, 1
    %v100 = vadd.f32 %v98, %v99
    %v101 = vmax.f32 %v90, 1.0
    %v102 = vmax.f32 %v93, 1.0
    %v103 = vrsqrt.pop %v101
    %v104 = vmul.f32 %v103, %v101
    %v105 = vmul.f32 %v104, %v103
    %v106 = vmul.f32 0.5, %v105
    %v107 = vsub.f32 1.5, %v106
    %v108 = vmul.f32 %v103, %v107
    %vm109 = vweird.f32 %v101
    %vm110 = vweird.f32 %v103
    %vm111 = vmor %vm109, %vm110
    %v112 = vsel %vm111, %v103, %v108
    %v113 = vrsqrt.pop %v102
    %v114 = vmul.f32 %v113, %v102
    %v115 = vmul.f32 %v114, %v113
    %v116 = vmul.f32 0.5, %v115
    %v117 = vsub.f32 1.5, %v116
    %v118 = vmul.f32 %v113, %v117
    %vm119 = vweird.f32 %v102
    %vm120 = vweird.f32 %v113
    %vm121 = vmor %vm119, %vm120
    %v122 = vsel %vm121, %v113, %v118
    %v123 = vmax.f32 %v100, 1.0
    %v124 = vrsqrt.pop %v123
    %v125 = vmul.f32 %v124, %v123
    %v126 = vmul.f32 %v125, %v124
    %v127 = vmul.f32 0.5, %v126
    %v128 = vsub.f32 1.5, %v127
    %v129 = vmul.f32 %v124, %v128
    %vm130 = vweird.f32 %v123
    %vm131 = vweird.f32 %v124
    %vm132 = vmor %vm130, %vm131
    %v133 = vsel %vm132, %v124, %v129
    %v134 = vmul.f32 %v85, %v112
    %v135 = vmul.f32 %v86, %v122
    %v136 = vmul.f32 %v134, %v133
    %v137 = vmul.f32 %v135, %v133
    %v138 = vld [vmem:[%s0] sm:$0xff]
    %v139 = vld [vmem:[%s0 + $0x8] sm:$0xff]
    %v140 = vld [vmem:[%s3] sm:$0xff]
    %v141 = vld [vmem:[%s3 + $0x8] sm:$0xff]
    %v142 = vld [vmem:[%s3 + $0x10] sm:$0xff]
    %v143 = vld [vmem:[%s1] sm:$0xff]
    %v144 = vld [vmem:[%s1 + $0x8] sm:$0xff]
    %v145 = vld [vmem:[%s4] sm:$0xff]
    %vm146 = vcmask 64512
    %v148 = vsel %vm146, %v143, 0
    %v151 = vsel %vm146, %v144, 0
    %153 = vmatpush.msra.mxu0 0.0
    %154 = vmatpush.msra.mxu0 0.0
    %155 = vmatpush.msra.mxu0 0.0
    %156 = vmatpush.msra.mxu0 0.0
    %157 = vmatpush.msra.mxu0 0.0
    %158 = vmatpush.msra.mxu0 0.0
    %159 = vmatpush.msra.mxu0 0.0
    %160 = vmatpush.msra.mxu0 0.0
    %161 = vmatpush.msra.mxu0 0.0
    %162 = vmatpush.msra.mxu0 0.0
    %163 = vmatpush.msra.mxu0 0.0
    %164 = vmatpush.msra.mxu0 0.0
    %165 = vmatpush.msra.mxu0 0.0
    %166 = vmatpush.msra.mxu0 0.0
    %167 = vmatpush.msra.mxu0 0.0
    %168 = vmatpush.msra.mxu0 %v145
    %169 = vmatmul.f32.gmra.mxu0 %v148
    %v170 = vpop.f32.mrf.mxu0
    %v171 = vadd.f32 0.0, %v170
    %172 = vmatmul.f32.gmra.mxu0 %v151
    %v173 = vpop.f32.mrf.mxu0
    %v174 = vadd.f32 0.0, %v173
    %175 = vdwg.mxu0
    %vm176 = vcmask 195584
    %v178 = vsel %vm176, %v138, 0
    %v181 = vsel %vm176, %v139, 0
    %183 = vmatpush.msra.mxu0 0.0
    %184 = vmatpush.msra.mxu0 0.0
    %185 = vmatpush.msra.mxu0 0.0
    %186 = vmatpush.msra.mxu0 0.0
    %187 = vmatpush.msra.mxu0 0.0
    %188 = vmatpush.msra.mxu0 0.0
    %189 = vmatpush.msra.mxu0 0.0
    %190 = vmatpush.msra.mxu0 0.0
    %191 = vmatpush.msra.mxu0 0.0
    %192 = vmatpush.msra.mxu0 0.0
    %193 = vmatpush.msra.mxu0 0.0
    %194 = vmatpush.msra.mxu0 0.0
    %195 = vmatpush.msra.mxu0 0.0
    %196 = vmatpush.msra.mxu0 %v142
    %197 = vmatpush.msra.mxu0 %v141
    %198 = vmatpush.msra.mxu0 %v140
    %199 = vmatmul.f32.gmra.mxu0 %v178
    %v200 = vpop.f32.mrf.mxu0
    %v201 = vadd.f32 %v171, %v200
    %202 = vmatmul.f32.gmra.mxu0 %v181
    %v203 = vpop.f32.mrf.mxu0
    %v204 = vadd.f32 %v174, %v203
    %205 = vdwg.mxu0
    %v206 = vld [vmem:[#allocation3] sm:$0x1]
    %v208 = vperm.slane %v206, 0
    %v211 = vsel %vm87, %v136, 0
    %v214 = vsel %vm87, %v137, 0
    %216 = vmatpush.msra.mxu0 0.0
    %217 = vmatpush.msra.mxu0 0.0
    %218 = vmatpush.msra.mxu0 0.0
    %219 = vmatpush.msra.mxu0 0.0
    %220 = vmatpush.msra.mxu0 0.0
    %221 = vmatpush.msra.mxu0 0.0
    %222 = vmatpush.msra.mxu0 0.0
    %223 = vmatpush.msra.mxu0 0.0
    %224 = vmatpush.msra.mxu0 0.0
    %225 = vmatpush.msra.mxu0 0.0
    %226 = vmatpush.msra.mxu0 0.0
    %227 = vmatpush.msra.mxu0 0.0
    %228 = vmatpush.msra.mxu0 0.0
    %229 = vmatpush.msra.mxu0 0.0
    %230 = vmatpush.msra.mxu0 %v204
    %231 = vmatpush.msra.mxu0 %v201
    %232 = vmatmul.f32.gmra.mxu0 %v211
    %v233 = vpop.f32.mrf.mxu0
    %v234 = vadd.f32 %v208, %v233
    %235 = vmatmul.f32.gmra.mxu0 %v214
    %v236 = vpop.f32.mrf.mxu0
    %v237 = vadd.f32 %v208, %v236
    %238 = vdwg.mxu0
    %v239 = vmax.f32 %v234, 0.0
    %v240 = vmax.f32 %v237, 0.0
    %v241 = vld [vmem:[%s6] sm:$0xff]
    %v242 = vld [vmem:[%s6 + $0x8] sm:$0xff]
    %v243 = vld [vmem:[%s6 + $0x10] sm:$0xff]
    %v244 = vld [vmem:[%s6 + $0x18] sm:$0xff]
    %vm245 = vcmask 261120
    %v247 = vsel %vm245, %v239, 0
    %v250 = vsel %vm245, %v240, 0
    %252 = vmatpush.msra.mxu0 0.0
    %253 = vmatpush.msra.mxu0 0.0
    %254 = vmatpush.msra.mxu0 0.0
    %255 = vmatpush.msra.mxu0 0.0
    %256 = vmatpush.msra.mxu0 0.0
    %257 = vmatpush.msra.mxu0 0.0
    %258 = vmatpush.msra.mxu0 0.0
    %259 = vmatpush.msra.mxu0 0.0
    %260 = vmatpush.msra.mxu0 0.0
    %261 = vmatpush.msra.mxu0 0.0
    %262 = vmatpush.msra.mxu0 0.0
    %263 = vmatpush.msra.mxu0 0.0
    %264 = vmatpush.msra.mxu0 %v244
    %265 = vmatpush.msra.mxu0 %v243
    %266 = vmatpush.msra.mxu0 %v242
    %267 = vmatpush.msra.mxu0 %v241
    %268 = vmatmul.f32.gmra.mxu0 %v247
    %v269 = vpop.f32.mrf.mxu0
    %v270 = vadd.f32 0.0, %v269
    %271 = vmatmul.f32.gmra.mxu0 %v250
    %v272 = vpop.f32.mrf.mxu0
    %v273 = vadd.f32 0.0, %v272
    %274 = vdwg.mxu0
    %v275 = vld [vmem:[#allocation6] sm:$0x1]
    %v277 = vperm.slane %v275, 0
    %279 = vmatpush.msra.mxu0 0.0
    %280 = vmatpush.msra.mxu0 0.0
    %281 = vmatpush.msra.mxu0 0.0
    %282 = vmatpush.msra.mxu0 0.0
    %283 = vmatpush.msra.mxu0 0.0
    %284 = vmatpush.msra.mxu0 0.0
    %285 = vmatpush.msra.mxu0 0.0
    %286 = vmatpush.msra.mxu0 0.0
    %287 = vmatpush.msra.mxu0 0.0
    %288 = vmatpush.msra.mxu0 0.0
    %289 = vmatpush.msra.mxu0 0.0
    %290 = vmatpush.msra.mxu0 0.0
    %291 = vmatpush.msra.mxu0 0.0
    %292 = vmatpush.msra.mxu0 0.0
    %293 = vmatpush.msra.mxu0 %v273
    %294 = vmatpush.msra.mxu0 %v270
    %295 = vmatmul.f32.gmra.mxu0 %v211
    %v296 = vpop.f32.mrf.mxu0
    %v297 = vadd.f32 %v277, %v296
    %298 = vmatmul.f32.gmra.mxu0 %v214
    %v299 = vpop.f32.mrf.mxu0
    %v300 = vadd.f32 %v277, %v299
    %301 = vdwg.mxu0
    %v302 = vmax.f32 %v297, 0.0
    %v303 = vmax.f32 %v300, 0.0
    %v304 = vld [vmem:[%s8] sm:$0xff]
    %v305 = vld [vmem:[%s8 + $0x8] sm:$0xff]
    %v306 = vld [vmem:[%s8 + $0x10] sm:$0xff]
    %v307 = vld [vmem:[%s8 + $0x18] sm:$0xff]
    %v309 = vsel %vm245, %v302, 0
    %v312 = vsel %vm245, %v303, 0
    %314 = vmatpush.msra.mxu0 0.0
    %315 = vmatpush.msra.mxu0 0.0
    %316 = vmatpush.msra.mxu0 0.0
    %317 = vmatpush.msra.mxu0 0.0
    %318 = vmatpush.msra.mxu0 0.0
    %319 = vmatpush.msra.mxu0 0.0
    %320 = vmatpush.msra.mxu0 0.0
    %321 = vmatpush.msra.mxu0 0.0
    %322 = vmatpush.msra.mxu0 0.0
    %323 = vmatpush.msra.mxu0 0.0
    %324 = vmatpush.msra.mxu0 0.0
    %325 = vmatpush.msra.mxu0 0.0
    %326 = vmatpush.msra.mxu0 %v307
    %327 = vmatpush.msra.mxu0 %v306
    %328 = vmatpush.msra.mxu0 %v305
    %329 = vmatpush.msra.mxu0 %v304
    %330 = vmatmul.f32.gmra.mxu0 %v309
    %v331 = vpop.f32.mrf.mxu0
    %v332 = vadd.f32 0.0, %v331
    %333 = vmatmul.f32.gmra.mxu0 %v312
    %v334 = vpop.f32.mrf.mxu0
    %v335 = vadd.f32 0.0, %v334
    %336 = vdwg.mxu0
    %v337 = vld [vmem:[#allocation8] sm:$0x1]
    %v339 = vperm.slane %v337, 0
    %341 = vmatpush.msra.mxu0 0.0
    %342 = vmatpush.msra.mxu0 0.0
    %343 = vmatpush.msra.mxu0 0.0
    %344 = vmatpush.msra.mxu0 0.0
    %345 = vmatpush.msra.mxu0 0.0
    %346 = vmatpush.msra.mxu0 0.0
    %347 = vmatpush.msra.mxu0 0.0
    %348 = vmatpush.msra.mxu0 0.0
    %349 = vmatpush.msra.mxu0 0.0
    %350 = vmatpush.msra.mxu0 0.0
    %351 = vmatpush.msra.mxu0 0.0
    %352 = vmatpush.msra.mxu0 0.0
    %353 = vmatpush.msra.mxu0 0.0
    %354 = vmatpush.msra.mxu0 0.0
    %355 = vmatpush.msra.mxu0 %v335
    %356 = vmatpush.msra.mxu0 %v332
    %357 = vmatmul.f32.gmra.mxu0 %v211
    %v358 = vpop.f32.mrf.mxu0
    %v359 = vadd.f32 %v339, %v358
    %360 = vmatmul.f32.gmra.mxu0 %v214
    %v361 = vpop.f32.mrf.mxu0
    %v362 = vadd.f32 %v339, %v361
    %363 = vdwg.mxu0
    %v364 = vmax.f32 %v359, 0.0
    %v365 = vmax.f32 %v362, 0.0
    %v366 = vsel %vm245, %v364, 0.0
    %v367 = vsel %vm245, %v365, 0.0
    %v368 = vadd.f32 %v366, %v367
    %v369 = vrot.slane %v368, 4
    %v370 = vadd.f32 %v368, %v369
    %v371 = vrot.slane %v370, 2
    %v372 = vadd.f32 %v370, %v371
    %v373 = vrot.slane %v372, 1
    %v374 = vadd.f32 %v372, %v373
    %v375 = vrcp.pop 16.0
    %v376 = vmul.f32 16.0, %v375
    %v377 = vsub.f32 1.0, %v376
    %v378 = vmul.f32 %v375, %v377
    %v379 = vadd.f32 %v375, %v378
    %vm380 = vweird.f32 %v375
    %v381 = vsel %vm380, %v375, %v379
    %v382 = vmul.f32 %v374, %v381
    %v383 = vld [vmem:[%s10] sm:$0xff]
    %v384 = vld [vmem:[%s10 + $0x8] sm:$0xff]
    %v385 = vld [vmem:[%s10 + $0x10] sm:$0xff]
    %v386 = vld [vmem:[%s10 + $0x18] sm:$0xff]
    %v387 = vld [vmem:[#allocation2] sm:$0x1]
    %v389 = vsel %vm245, %v382, 0
    %391 = vmatpush.msra.mxu0 0.0
    %392 = vmatpush.msra.mxu0 0.0
    %393 = vmatpush.msra.mxu0 0.0
    %394 = vmatpush.msra.mxu0 0.0
    %395 = vmatpush.msra.mxu0 0.0
    %396 = vmatpush.msra.mxu0 0.0
    %397 = vmatpush.msra.mxu0 0.0
    %398 = vmatpush.msra.mxu0 0.0
    %399 = vmatpush.msra.mxu0 0.0
    %400 = vmatpush.msra.mxu0 0.0
    %401 = vmatpush.msra.mxu0 0.0
    %402 = vmatpush.msra.mxu0 0.0
    %403 = vmatpush.msra.mxu0 %v386
    %404 = vmatpush.msra.mxu0 %v385
    %405 = vmatpush.msra.mxu0 %v384
    %406 = vmatpush.msra.mxu0 %v383
    %407 = vmatmul.f32.gmra.mxu0 %v389
    %v408 = vpop.f32.mrf.mxu0
    %v409 = vadd.f32 %v387, %v408
    %410 = vdwg.mxu0
    %v411 = vxor.u32 %v409, 2147483648
    %v412 = vmul.f32 %v411, 1.442695
    %v413 = vpow.pop %v412
    %v414 = vadd.f32 %v413, 1.0
    %v415 = vrcp.pop %v414
    %v416 = vmul.f32 %v414, %v415
    %v417 = vsub.f32 1.0, %v416
    %v418 = vmul.f32 %v415, %v417
    %v419 = vadd.f32 %v415, %v418
    %vm420 = vweird.f32 %v414
    %vm421 = vweird.f32 %v415
    %vm422 = vmor %vm420, %vm421
    %v423 = vsel %vm422, %v415, %v419
    %v424 = vand.u32 2147483647, %v414
    %vm425 = vcmp.eq.f32.partialorder %v424, 8.507059e+37
    %v426 = vand.u32 %v414, 2147483648
    %v427 = vor.u32 1.1754944e-38, %v426
    %v428 = vsel %vm425, %v427, %v423
    %v429 = vmul.f32 1.0, %v428
    %vm430 = vcmask 0
    %431 = vst.msk [vmem:[#allocation9] sm:$0x1] %vm430, %v429
    // Predicated region
    $region62: #{gcn3_names_forward.1} parent=1 // pred_check
      _
    $region63: #{gcn3_names_forward.1} parent=1 // pred_check_branch
      %433 = sbr.rel (0) target = $region65
    $region64: #{gcn3_names_forward.1} parent=1 // pred_region
      %435 = vsyncadd [#allocation5], 0
      %s437 = sshll.u32 [#allocation9], 4
      %s438 = int_to_ptr.vmem [resolvable:$true] %s437
      %s439 = sshll.u32 %s12, 4
      %s440 = int_to_ptr.hbm [resolvable:$true] %s439
      %442 = dma.vmem_to_hbm [thread:$0]  %s438, 16, %s440, [#allocation5]
    $region65: #{gcn3_names_forward.1} parent=1 // pred_fallthru
      _
    // Predicated region
    $region66: #{gcn3_names_forward.1} parent=1 // pred_check
      _
    $region67: #{gcn3_names_forward.1} parent=1 // pred_check_branch
      %444 = sbr.rel (0) target = $region69
    $region68: #{gcn3_names_forward.1} parent=1 // pred_region
      %446 = dma.done [#allocation5], 16
    $region69: #{gcn3_names_forward.1} parent=1 // pred_fallthru
      _
    %447 = vsyncpa [#allocation4], 1
    %448 = vsyncpa [#allocation7], 1
    %449 = vsyncpa [#allocation5], 1

</llo_original>
